<compile_context>
chip_gen: v5e
topology: v5e:2x2
jax: 0.10.0
libtpu: 0.0.40
codegen_flags: <defaults>
</compile_context>

<pallas_src>
import numpy as np
import jax
import jax.numpy as jnp
from jax.experimental import pallas as pl
from jax.experimental.pallas import tpu as pltpu


def _round_up(n, m):
    return -(-n // m) * m


# ----------------------------------------------------------------------------
# Pallas kernel: entire Fea_encoder forward for one batch tile (batch in lanes).
# ----------------------------------------------------------------------------
def fea_encoder_kernel(x_ref, w1_ref, w2_ref, b2_ref, w3_ref, b3_ref,
                       w4_ref, b4_ref, o_ref):
    x = x_ref[...]                                                    # (8, TB); row 7 = 1.0

    # Conv1d(1->8, k=4, 'same') + bias (folded via ones row) + ReLU.
    # Rows = pos*8 + ch.
    y1 = jnp.maximum(
        jnp.dot(w1_ref[...], x, preferred_element_type=jnp.float32), 0.0)   # (56, TB)

    # MaxPool1d(2) fused: pooled[r] = max(y1[r], y1[r+8]).  Useful row bands
    # 0:8 (pool pos 0), 16:24 (pos 1), 32:40 (pos 2); bands 8:16 / 24:32 are
    # junk and hit zero columns of W2.  Both slices are 8-sublane aligned.
    pooled = jnp.maximum(y1[0:40, :], y1[8:48, :])                    # (40, TB)

    # Conv1d(8->32, k=4, 'same') + ReLU as ONE dot (K=40); rows = pos*32 + ch.
    y2 = jnp.maximum(
        jnp.dot(w2_ref[...], pooled, preferred_element_type=jnp.float32)
        + b2_ref[...], 0.0)                                           # (96, TB)

    # MaxPool1d(2) on length-3 (pos 2 dropped) -> Flatten: rows = channel.
    z2 = jnp.maximum(y2[0:32, :], y2[32:64, :])                       # (32, TB)

    # Linear(32->64) + ReLU
    y3 = jnp.maximum(
        jnp.dot(w3_ref[...], z2, preferred_element_type=jnp.float32)
        + b3_ref[...], 0.0)                                           # (64, TB)

    # Linear(64->7) padded to 8 output rows (row 7 is junk): aligned (8,TB) store.
    o_ref[...] = (jnp.dot(w4_ref[...], y3, preferred_element_type=jnp.float32)
                  + b4_ref[...]).astype(o_ref.dtype)                  # (8, TB)


# ----------------------------------------------------------------------------
# Parameter init (deterministic, PyTorch-default-style uniform bounds).
# Raw parameters keep the PyTorch layouts:
#   conv weight (out, in, k), linear weight (out, in).
# ----------------------------------------------------------------------------
def init_params(key):
    ks = jax.random.split(key, 8)

    def u(k, shape, fan_in):
        bound = 1.0 / np.sqrt(fan_in)
        return jax.random.uniform(k, shape, jnp.float32, -bound, bound)

    w1 = u(ks[0], (8, 1, 4), 1 * 4);  b1 = u(ks[1], (8,), 1 * 4)
    w2 = u(ks[2], (32, 8, 4), 8 * 4); b2 = u(ks[3], (32,), 8 * 4)
    w3 = u(ks[4], (64, 32), 32);      b3 = u(ks[5], (64,), 32)
    w4 = u(ks[6], (7, 64), 64);       b4 = u(ks[7], (7,), 64)
    return w1, b1, w2, b2, w3, b3, w4, b4


# ----------------------------------------------------------------------------
# Glue: lower the two tiny 'same'-padded convs to dense feature-major matrices.
# PyTorch 'same' padding for kernel=4, stride=1  ->  pad left=1, right=2.
# All matrices are laid out for  y = W @ x  with x = (Cin_padded, TB).
# ----------------------------------------------------------------------------
def pack_params(params):
    w1, b1, w2, b2, w3, b3, w4, b4 = (np.asarray(p) for p in params)

    # Conv1: input (8, TB) where rows 0:7 are the signal and row 7 == 1.0.
    # Output rows = t*8 + c (pos-major).  Column 7 carries the bias.
    W1m = np.zeros((56, 8), np.float32)
    for t in range(7):
        for k in range(4):
            i = t + k - 1                           # left pad = 1
            if 0 <= i < 7:
                W1m[t * 8:(t + 1) * 8, i] = w1[:, 0, k]
    W1m[:, 7] = np.tile(b1, 7)                      # bias folded into matmul

    # Conv2: input = pooled (40, TB); pool position p, channel c lives at row
    # p*16 + c (rows 8:16 and 24:32 are junk -> columns stay zero).
    # Output rows = t*32 + cout.
    W2m = np.zeros((96, 40), np.float32)
    for t in range(3):
        for k in range(4):
            p = t + k - 1                           # left pad = 1
            if 0 <= p < 3:
                W2m[t * 32:(t + 1) * 32, p * 16:p * 16 + 8] = w2[:, :, k]
    B2m = np.tile(b2, 3)[:, None].astype(np.float32)          # (96, 1)

    W3m = w3.astype(np.float32)                                # (64, 32)
    B3m = b3[:, None].astype(np.float32)                       # (64, 1)

    # FC2 padded to 8 output rows (row 7 zero) for an aligned output slab.
    W4m = np.zeros((8, 64), np.float32); W4m[:7] = w4
    B4m = np.zeros((8, 1), np.float32);  B4m[:7, 0] = b4

    return tuple(jnp.asarray(a) for a in (W1m, W2m, B2m, W3m, B3m, W4m, B4m))


# ----------------------------------------------------------------------------
# Wrapper: pallas_call with batch tiling (batch in lanes, padded batch).
# ----------------------------------------------------------------------------
def fea_encoder(x, packed, *, tb=2048):
    assert tb % 128 == 0, "tb must be a multiple of 128"
    xf = x.reshape(-1, 7).astype(jnp.float32)       # torch: input.reshape(-1, 1, 7)
    B = xf.shape[0]

    # Effective tile: cap by (padded) batch so tiny batches don't over-pad.
    tb_eff = min(tb, _round_up(B, 8))
    Bp = _round_up(B, tb_eff)

    # Feature-major (8, B): rows 0:7 = features, row 7 = 1.0 (bias carrier).
    xt = jnp.concatenate([xf.T, jnp.ones((1, B), jnp.float32)], axis=0)
    if Bp != B:
        xt = jnp.pad(xt, ((0, 0), (0, Bp - B)))     # padded cols are junk, sliced off

    W1m, W2m, B2m, W3m, B3m, W4m, B4m = packed

    def full(shape):
        return pl.BlockSpec(shape, lambda i: (0, 0))

    out_t = pl.pallas_call(
        fea_encoder_kernel,
        out_shape=jax.ShapeDtypeStruct((8, Bp), jnp.float32),
        grid_spec=pltpu.PrefetchScalarGridSpec(
            num_scalar_prefetch=0,
            grid=(Bp // tb_eff,),
            in_specs=[
                pl.BlockSpec((8, tb_eff), lambda i: (0, i)),   # x tile (lane-dense)
                full((56, 8)),                                 # conv1 (+bias folded)
                full((96, 40)), full((96, 1)),                 # conv2 (pool-fused matmul)
                full((64, 32)), full((64, 1)),                 # fc1
                full((8, 64)), full((8, 1)),                   # fc2 (padded to 8 rows)
            ],
            out_specs=pl.BlockSpec((8, tb_eff), lambda i: (0, i)),
        ),
        compiler_params=pltpu.CompilerParams(
            dimension_semantics=("parallel",)),                # megacore-shardable on v7x
    )(xt, W1m, W2m, B2m, W3m, B3m, W4m, B4m)

    return out_t[:7, :B].T                                     # (B, 7)


# ----------------------------------------------------------------------------
# Pure-JAX reference (direct conv/pool semantics) for correctness check.
# ----------------------------------------------------------------------------
def ref_forward(xf, params):
    w1, b1, w2, b2, w3, b3, w4, b4 = params
    B = xf.shape[0]
    xp = jnp.pad(xf, ((0, 0), (1, 2)))                              # 'same', k=4
    win1 = jnp.stack([xp[:, t:t + 4] for t in range(7)], axis=1)    # (B,7,4)
    y1 = jnp.einsum('btk,ck->bct', win1, w1[:, 0, :]) + b1[None, :, None]
    y1 = jnp.maximum(y1, 0.0)                                       # (B,8,7)
    y1p = jnp.max(y1[:, :, :6].reshape(B, 8, 3, 2), axis=3)         # (B,8,3)
    y1pp = jnp.pad(y1p, ((0, 0), (0, 0), (1, 2)))                   # (B,8,6)
    win2 = jnp.stack([y1pp[:, :, t:t + 4] for t in range(3)], axis=2)  # (B,8,3,4)
    y2 = jnp.einsum('bitk,oik->bot', win2, w2) + b2[None, :, None]
    y2 = jnp.maximum(y2, 0.0)                                       # (B,32,3)
    y2p = jnp.max(y2[:, :, :2], axis=2)                             # (B,32)
    y3 = jnp.maximum(y2p @ w3.T + b3, 0.0)
    return y3 @ w4.T + b4                                           # (B,7)


if __name__ == "__main__":
    key = jax.random.PRNGKey(0)
    kx, kx2, kp = jax.random.split(key, 3)

    params = init_params(kp)
    packed = pack_params(params)

    # Small demo input: any shape whose total size is a multiple of 7
    # (module reshapes to (-1, 1, 7)).  (2, 8, 7) -> B = 16 signals.
    x = jax.random.normal(kx, (2, 8, 7), jnp.float32)
    out = jax.block_until_ready(fea_encoder(x, packed))             # grid = 1 path
    ref = ref_forward(x.reshape(-1, 7).astype(jnp.float32), params)
    assert out.shape == (16, 7)
    assert jnp.allclose(out, ref, atol=5e-4, rtol=5e-4), \
        float(jnp.max(jnp.abs(out - ref)))

    # Second check exercising the multi-step grid (tiling + padding path).
    x2 = jax.random.normal(kx2, (300, 7), jnp.float32)              # B = 300 (padded to 384)
    out2 = jax.block_until_ready(fea_encoder(x2, packed, tb=128))   # grid = 3
    ref2 = ref_forward(x2.astype(jnp.float32), params)
    assert out2.shape == (300, 7)
    assert jnp.allclose(out2, ref2, atol=5e-4, rtol=5e-4), \
        float(jnp.max(jnp.abs(out2 - ref2)))

    print("KERNEL_OK")
</pallas_src>

<mosaic_0001>
module attributes {stable_mosaic.version = 11 : i64} {
  func.func @fea_encoder_kernel(%arg0: i32, %arg1: memref<8x16xf32, #tpu.memory_space<vmem>>, %arg2: memref<56x8xf32, #tpu.memory_space<vmem>>, %arg3: memref<96x40xf32, #tpu.memory_space<vmem>>, %arg4: memref<96x1xf32, #tpu.memory_space<vmem>>, %arg5: memref<64x32xf32, #tpu.memory_space<vmem>>, %arg6: memref<64x1xf32, #tpu.memory_space<vmem>>, %arg7: memref<8x64xf32, #tpu.memory_space<vmem>>, %arg8: memref<8x1xf32, #tpu.memory_space<vmem>>, %arg9: memref<8x16xf32, #tpu.memory_space<vmem>>) attributes {dimension_semantics = [#tpu.dimension_semantics<parallel>], iteration_bounds = array<i64: 1>, scalar_prefetch = 0 : i64, scratch_operands = 0 : i64, tpu.core_type = #tpu.core_type<tc>, window_params = [{transform_indices = @transform_0, window_bounds = array<i64: 8, 16>}, {pipeline_mode = #tpu.pipeline_mode<synchronous>, transform_indices = @transform_1, window_bounds = array<i64: 56, 8>}, {pipeline_mode = #tpu.pipeline_mode<synchronous>, transform_indices = @transform_2, window_bounds = array<i64: 96, 40>}, {pipeline_mode = #tpu.pipeline_mode<synchronous>, transform_indices = @transform_3, window_bounds = array<i64: 96, 1>}, {pipeline_mode = #tpu.pipeline_mode<synchronous>, transform_indices = @transform_4, window_bounds = array<i64: 64, 32>}, {pipeline_mode = #tpu.pipeline_mode<synchronous>, transform_indices = @transform_5, window_bounds = array<i64: 64, 1>}, {pipeline_mode = #tpu.pipeline_mode<synchronous>, transform_indices = @transform_6, window_bounds = array<i64: 8, 64>}, {pipeline_mode = #tpu.pipeline_mode<synchronous>, transform_indices = @transform_7, window_bounds = array<i64: 8, 1>}, {transform_indices = @transform_8, window_bounds = array<i64: 8, 16>}]} {
    %c0 = arith.constant 0 : index
    %c0_0 = arith.constant 0 : index
    %0 = vector.load %arg1[%c0, %c0_0] : memref<8x16xf32, #tpu.memory_space<vmem>>, vector<8x16xf32>
    %c0_1 = arith.constant 0 : index
    %c0_2 = arith.constant 0 : index
    %1 = vector.load %arg2[%c0_1, %c0_2] : memref<56x8xf32, #tpu.memory_space<vmem>>, vector<56x8xf32>
    %cst = arith.constant dense<0.000000e+00> : vector<56x16xf32>
    %2 = tpu.matmul %1, %0, %cst {dimension_numbers = #tpu.dot_dimension_numbers<[1], [0], [0], [1], [0, 0, 1, 1], [], []>} : vector<56x8xf32>, vector<8x16xf32>, vector<56x16xf32> -> vector<56x16xf32>
    %cst_3 = arith.constant 0.000000e+00 : f32
    %3 = vector.broadcast %cst_3 : f32 to vector<56x16xf32>
    %4 = arith.maximumf %2, %3 : vector<56x16xf32>
    %5 = vector.extract_strided_slice %4 {offsets = [0, 0], sizes = [40, 16], strides = [1, 1]} : vector<56x16xf32> to vector<40x16xf32>
    %6 = vector.extract_strided_slice %4 {offsets = [8, 0], sizes = [40, 16], strides = [1, 1]} : vector<56x16xf32> to vector<40x16xf32>
    %7 = arith.maximumf %5, %6 : vector<40x16xf32>
    %c0_4 = arith.constant 0 : index
    %c0_5 = arith.constant 0 : index
    %8 = vector.load %arg3[%c0_4, %c0_5] : memref<96x40xf32, #tpu.memory_space<vmem>>, vector<96x40xf32>
    %cst_6 = arith.constant dense<0.000000e+00> : vector<96x16xf32>
    %9 = tpu.matmul %8, %7, %cst_6 {dimension_numbers = #tpu.dot_dimension_numbers<[1], [0], [0], [1], [0, 0, 1, 1], [], []>} : vector<96x40xf32>, vector<40x16xf32>, vector<96x16xf32> -> vector<96x16xf32>
    %c0_7 = arith.constant 0 : index
    %c0_8 = arith.constant 0 : index
    %10 = vector.load %arg4[%c0_7, %c0_8] : memref<96x1xf32, #tpu.memory_space<vmem>>, vector<96x1xf32>
    %11 = vector.broadcast %10 : vector<96x1xf32> to vector<96x16xf32>
    %12 = arith.addf %9, %11 : vector<96x16xf32>
    %cst_9 = arith.constant 0.000000e+00 : f32
    %13 = vector.broadcast %cst_9 : f32 to vector<96x16xf32>
    %14 = arith.maximumf %12, %13 : vector<96x16xf32>
    %15 = vector.extract_strided_slice %14 {offsets = [0, 0], sizes = [32, 16], strides = [1, 1]} : vector<96x16xf32> to vector<32x16xf32>
    %16 = vector.extract_strided_slice %14 {offsets = [32, 0], sizes = [32, 16], strides = [1, 1]} : vector<96x16xf32> to vector<32x16xf32>
    %17 = arith.maximumf %15, %16 : vector<32x16xf32>
    %c0_10 = arith.constant 0 : index
    %c0_11 = arith.constant 0 : index
    %18 = vector.load %arg5[%c0_10, %c0_11] : memref<64x32xf32, #tpu.memory_space<vmem>>, vector<64x32xf32>
    %cst_12 = arith.constant dense<0.000000e+00> : vector<64x16xf32>
    %19 = tpu.matmul %18, %17, %cst_12 {dimension_numbers = #tpu.dot_dimension_numbers<[1], [0], [0], [1], [0, 0, 1, 1], [], []>} : vector<64x32xf32>, vector<32x16xf32>, vector<64x16xf32> -> vector<64x16xf32>
    %c0_13 = arith.constant 0 : index
    %c0_14 = arith.constant 0 : index
    %20 = vector.load %arg6[%c0_13, %c0_14] : memref<64x1xf32, #tpu.memory_space<vmem>>, vector<64x1xf32>
    %21 = vector.broadcast %20 : vector<64x1xf32> to vector<64x16xf32>
    %22 = arith.addf %19, %21 : vector<64x16xf32>
    %cst_15 = arith.constant 0.000000e+00 : f32
    %23 = vector.broadcast %cst_15 : f32 to vector<64x16xf32>
    %24 = arith.maximumf %22, %23 : vector<64x16xf32>
    %c0_16 = arith.constant 0 : index
    %c0_17 = arith.constant 0 : index
    %25 = vector.load %arg7[%c0_16, %c0_17] : memref<8x64xf32, #tpu.memory_space<vmem>>, vector<8x64xf32>
    %cst_18 = arith.constant dense<0.000000e+00> : vector<8x16xf32>
    %26 = tpu.matmul %25, %24, %cst_18 {dimension_numbers = #tpu.dot_dimension_numbers<[1], [0], [0], [1], [0, 0, 1, 1], [], []>} : vector<8x64xf32>, vector<64x16xf32>, vector<8x16xf32> -> vector<8x16xf32>
    %c0_19 = arith.constant 0 : index
    %c0_20 = arith.constant 0 : index
    %27 = vector.load %arg8[%c0_19, %c0_20] : memref<8x1xf32, #tpu.memory_space<vmem>>, vector<8x1xf32>
    %28 = vector.broadcast %27 : vector<8x1xf32> to vector<8x16xf32>
    %29 = arith.addf %26, %28 : vector<8x16xf32>
    %c0_21 = arith.constant 0 : index
    %c0_22 = arith.constant 0 : index
    %30 = vector.load %arg9[%c0_21, %c0_22] : memref<8x16xf32, #tpu.memory_space<vmem>>, vector<8x16xf32>
    tpu.vector_store %arg9[%c0_21, %c0_22], %29 {strides = array<i32>} : memref<8x16xf32, #tpu.memory_space<vmem>>, vector<8x16xf32>,
    return
  }
  func.func @transform_0(%arg0: i32) -> (i32, i32) {
    %c0_i32 = arith.constant 0 : i32
    %c0_i32_0 = arith.constant 0 : i32
    return %c0_i32, %arg0 : i32, i32
  }
  func.func @transform_1(%arg0: i32) -> (i32, i32) {
    %c0_i32 = arith.constant 0 : i32
    %c0_i32_0 = arith.constant 0 : i32
    %c0_i32_1 = arith.constant 0 : i32
    return %c0_i32, %c0_i32_0 : i32, i32
  }
  func.func @transform_2(%arg0: i32) -> (i32, i32) {
    %c0_i32 = arith.constant 0 : i32
    %c0_i32_0 = arith.constant 0 : i32
    %c0_i32_1 = arith.constant 0 : i32
    return %c0_i32, %c0_i32_0 : i32, i32
  }
  func.func @transform_3(%arg0: i32) -> (i32, i32) {
    %c0_i32 = arith.constant 0 : i32
    %c0_i32_0 = arith.constant 0 : i32
    %c0_i32_1 = arith.constant 0 : i32
    return %c0_i32, %c0_i32_0 : i32, i32
  }
  func.func @transform_4(%arg0: i32) -> (i32, i32) {
    %c0_i32 = arith.constant 0 : i32
    %c0_i32_0 = arith.constant 0 : i32
    %c0_i32_1 = arith.constant 0 : i32
    return %c0_i32, %c0_i32_0 : i32, i32
  }
  func.func @transform_5(%arg0: i32) -> (i32, i32) {
    %c0_i32 = arith.constant 0 : i32
    %c0_i32_0 = arith.constant 0 : i32
    %c0_i32_1 = arith.constant 0 : i32
    return %c0_i32, %c0_i32_0 : i32, i32
  }
  func.func @transform_6(%arg0: i32) -> (i32, i32) {
    %c0_i32 = arith.constant 0 : i32
    %c0_i32_0 = arith.constant 0 : i32
    %c0_i32_1 = arith.constant 0 : i32
    return %c0_i32, %c0_i32_0 : i32, i32
  }
  func.func @transform_7(%arg0: i32) -> (i32, i32) {
    %c0_i32 = arith.constant 0 : i32
    %c0_i32_0 = arith.constant 0 : i32
    %c0_i32_1 = arith.constant 0 : i32
    return %c0_i32, %c0_i32_0 : i32, i32
  }
  func.func @transform_8(%arg0: i32) -> (i32, i32) {
    %c0_i32 = arith.constant 0 : i32
    %c0_i32_0 = arith.constant 0 : i32
    return %c0_i32, %arg0 : i32, i32
  }
}

</mosaic_0001>

<llo_original>
// kernel: tpu_custom_call.1
$region0: #{tpu_custom_call.1}
  #allocation0 [shape = 'u32[]', space=smem, size = 0x4, offset = 0x4, fixed_abs, tag = 'smem constant byte address 0x4 - core index']
  #allocation1 [shape = 'u32[72,128]{1,0:T(1,128)}', space=vmem, size = 0x9000, scoped, tag = 'internal scratch']
  %s0 = inlined_call_operand.vmem [shape: f32[8,16], index: 0, kind: input, shape index: {}]
  %s1 = inlined_call_operand.vmem [shape: f32[56,8], index: 1, kind: input, shape index: {}]
  %s2 = inlined_call_operand.vmem [shape: f32[96,40], index: 2, kind: input, shape index: {}]
  %s3 = inlined_call_operand.vmem [shape: f32[96,1], index: 3, kind: input, shape index: {}]
  %s4 = inlined_call_operand.vmem [shape: f32[64,32], index: 4, kind: input, shape index: {}]
  %s5 = inlined_call_operand.vmem [shape: f32[64,1], index: 5, kind: input, shape index: {}]
  %s6 = inlined_call_operand.vmem [shape: f32[8,64], index: 6, kind: input, shape index: {}]
  %s7 = inlined_call_operand.vmem [shape: f32[8,1], index: 7, kind: input, shape index: {}]
  %s8 = inlined_call_operand.hbm [shape: f32[8,16], index: 8, kind: output, shape index: {}]
  %s9 = sld [smem:[#allocation0]]
  $region42: #{tpu_custom_call.1} parent=0
    _
  %s11 = ssub.s32 1, %s9
  %s12 = scalar_select 0, %s11, %s9
  $region1: #{tpu_custom_call.1} parent=0
    #allocation2 [shape = 'u8[4096]{0}', space=vmem, size = 0x1000, scoped, tag = 'output window, operand 0, single buffered']
    #allocation3 [shape = 's32[1]{0}', space=sflag, size = 0x4, scoped, tag = 'scoped memory for tpu_custom_call.1']
    %13 = vsyncpa [#allocation3], 0
    // Predicated region
    $region2: #{tpu_custom_call.1} parent=1 // pred_check
      _
    $region3: #{tpu_custom_call.1} parent=1 // pred_check_branch
      %15 = sbr.rel (0) target = $region5
    $region4: #{tpu_custom_call.1} parent=1 // pred_region
      _
    $region5: #{tpu_custom_call.1} parent=1 // pred_fallthru
      _
    // Predicated region
    $region6: #{tpu_custom_call.1} parent=1 // pred_check
      _
    $region7: #{tpu_custom_call.1} parent=1 // pred_check_branch
      %17 = sbr.rel (0) target = $region9
    $region8: #{tpu_custom_call.1} parent=1 // pred_region
      _
    $region9: #{tpu_custom_call.1} parent=1 // pred_fallthru
      _
    // Predicated region
    $region10: #{tpu_custom_call.1} parent=1 // pred_check
      _
    $region11: #{tpu_custom_call.1} parent=1 // pred_check_branch
      %19 = sbr.rel (0) target = $region13
    $region12: #{tpu_custom_call.1} parent=1 // pred_region
      _
    $region13: #{tpu_custom_call.1} parent=1 // pred_fallthru
      _
    // Predicated region
    $region14: #{tpu_custom_call.1} parent=1 // pred_check
      _
    $region15: #{tpu_custom_call.1} parent=1 // pred_check_branch
      %21 = sbr.rel (0) target = $region17
    $region16: #{tpu_custom_call.1} parent=1 // pred_region
      _
    $region17: #{tpu_custom_call.1} parent=1 // pred_fallthru
      _
    // Predicated region
    $region18: #{tpu_custom_call.1} parent=1 // pred_check
      _
    $region19: #{tpu_custom_call.1} parent=1 // pred_check_branch
      %23 = sbr.rel (0) target = $region21
    $region20: #{tpu_custom_call.1} parent=1 // pred_region
      _
    $region21: #{tpu_custom_call.1} parent=1 // pred_fallthru
      _
    // Predicated region
    $region22: #{tpu_custom_call.1} parent=1 // pred_check
      _
    $region23: #{tpu_custom_call.1} parent=1 // pred_check_branch
      %25 = sbr.rel (0) target = $region25
    $region24: #{tpu_custom_call.1} parent=1 // pred_region
      _
    $region25: #{tpu_custom_call.1} parent=1 // pred_fallthru
      _
    // Predicated region
    $region26: #{tpu_custom_call.1} parent=1 // pred_check
      _
    $region27: #{tpu_custom_call.1} parent=1 // pred_check_branch
      %27 = sbr.rel (0) target = $region29
    $region28: #{tpu_custom_call.1} parent=1 // pred_region
      _
    $region29: #{tpu_custom_call.1} parent=1 // pred_fallthru
      _
    // Predicated region
    $region30: #{tpu_custom_call.1} parent=1 // pred_check
      _
    $region31: #{tpu_custom_call.1} parent=1 // pred_check_branch
      %29 = sbr.rel (0) target = $region33
    $region32: #{tpu_custom_call.1} parent=1 // pred_region
      _
    $region33: #{tpu_custom_call.1} parent=1 // pred_fallthru
      _
    %v30 = vld [vmem:[%s0] sm:$0xff]
    %v31 = vld [vmem:[%s1] sm:$0xff]
    %v32 = vld [vmem:[%s1 + $0x8] sm:$0xff]
    %v33 = vld [vmem:[%s1 + $0x10] sm:$0xff]
    %v34 = vld [vmem:[%s1 + $0x18] sm:$0xff]
    %v35 = vld [vmem:[%s1 + $0x20] sm:$0xff]
    %v36 = vld [vmem:[%s1 + $0x28] sm:$0xff]
    %v37 = vld [vmem:[%s1 + $0x30] sm:$0xff]
    %vm38 = vcmask 64512
    %v40 = vsel %vm38, %v31, 0
    %v43 = vsel %vm38, %v32, 0
    %v46 = vsel %vm38, %v33, 0
    %v49 = vsel %vm38, %v34, 0
    %v52 = vsel %vm38, %v35, 0
    %v55 = vsel %vm38, %v36, 0
    %v58 = vsel %vm38, %v37, 0
    %60 = vmatpush.msra.mxu0 0.0
    %61 = vmatpush.msra.mxu0 0.0
    %62 = vmatpush.msra.mxu0 0.0
    %63 = vmatpush.msra.mxu0 0.0
    %64 = vmatpush.msra.mxu0 0.0
    %65 = vmatpush.msra.mxu0 0.0
    %66 = vmatpush.msra.mxu0 0.0
    %67 = vmatpush.msra.mxu0 0.0
    %68 = vmatpush.msra.mxu0 0.0
    %69 = vmatpush.msra.mxu0 0.0
    %70 = vmatpush.msra.mxu0 0.0
    %71 = vmatpush.msra.mxu0 0.0
    %72 = vmatpush.msra.mxu0 0.0
    %73 = vmatpush.msra.mxu0 0.0
    %74 = vmatpush.msra.mxu0 0.0
    %75 = vmatpush.msra.mxu0 %v30
    %76 = vmatmul.f32.gmra.mxu0 %v40
    %v77 = vpop.f32.mrf.mxu0
    %v78 = vadd.f32 0.0, %v77
    %79 = vmatmul.f32.gmra.mxu0 %v43
    %v80 = vpop.f32.mrf.mxu0
    %v81 = vadd.f32 0.0, %v80
    %82 = vmatmul.f32.gmra.mxu0 %v46
    %v83 = vpop.f32.mrf.mxu0
    %v84 = vadd.f32 0.0, %v83
    %85 = vmatmul.f32.gmra.mxu0 %v49
    %v86 = vpop.f32.mrf.mxu0
    %v87 = vadd.f32 0.0, %v86
    %88 = vmatmul.f32.gmra.mxu0 %v52
    %v89 = vpop.f32.mrf.mxu0
    %v90 = vadd.f32 0.0, %v89
    %91 = vmatmul.f32.gmra.mxu0 %v55
    %v92 = vpop.f32.mrf.mxu0
    %v93 = vadd.f32 0.0, %v92
    %94 = vmatmul.f32.gmra.mxu0 %v58
    %v95 = vpop.f32.mrf.mxu0
    %96 = vdwg.mxu0
    %v97 = vmax.f32 %v78, 0.0
    %v98 = vmax.f32 %v81, 0.0
    %v99 = vmax.f32 %v84, 0.0
    %v100 = vmax.f32 %v87, 0.0
    %v101 = vmax.f32 %v90, 0.0
    %v102 = vmax.f32 %v93, 0.0
    %v103 = vmax.f32 %v97, %v98
    %v104 = vmax.f32 %v98, %v99
    %v105 = vmax.f32 %v99, %v100
    %v106 = vmax.f32 %v100, %v101
    %v107 = vmax.f32 %v101, %v102
    %v108 = vld [vmem:[%s2] sm:$0xff]
    %v109 = vld [vmem:[%s2 + $0x8] sm:$0xff]
    %v110 = vld [vmem:[%s2 + $0x10] sm:$0xff]
    %v111 = vld [vmem:[%s2 + $0x18] sm:$0xff]
    %v112 = vld [vmem:[%s2 + $0x20] sm:$0xff]
    %v113 = vld [vmem:[%s2 + $0x28] sm:$0xff]
    %v114 = vld [vmem:[%s2 + $0x30] sm:$0xff]
    %v115 = vld [vmem:[%s2 + $0x38] sm:$0xff]
    %v116 = vld [vmem:[%s2 + $0x40] sm:$0xff]
    %v117 = vld [vmem:[%s2 + $0x48] sm:$0xff]
    %v118 = vld [vmem:[%s2 + $0x50] sm:$0xff]
    %v119 = vld [vmem:[%s2 + $0x58] sm:$0xff]
    %v120 = vld [vmem:[%s3] sm:$0xff]
    %v121 = vld [vmem:[%s3 + $0x8] sm:$0xff]
    %v122 = vld [vmem:[%s3 + $0x10] sm:$0xff]
    %v123 = vld [vmem:[%s3 + $0x18] sm:$0xff]
    %v124 = vld [vmem:[%s3 + $0x20] sm:$0xff]
    %v125 = vld [vmem:[%s3 + $0x28] sm:$0xff]
    %v126 = vld [vmem:[%s3 + $0x30] sm:$0xff]
    %v127 = vld [vmem:[%s3 + $0x38] sm:$0xff]
    %v128 = vld [vmem:[%s3 + $0x40] sm:$0xff]
    %v129 = vld [vmem:[%s3 + $0x48] sm:$0xff]
    %v130 = vld [vmem:[%s3 + $0x50] sm:$0xff]
    %v131 = vld [vmem:[%s3 + $0x58] sm:$0xff]
    %133 = vset.pattern.permute.xlu0 0
    %134 = vperm.xlu0 %133, %v120
    %v135 = vpop.permute.xlu0 %134
    %138 = vset.pattern.permute.xlu0 0
    %139 = vperm.xlu0 %138, %v121
    %v140 = vpop.permute.xlu0 %139
    %143 = vset.pattern.permute.xlu0 0
    %144 = vperm.xlu0 %143, %v122
    %v145 = vpop.permute.xlu0 %144
    %148 = vset.pattern.permute.xlu0 0
    %149 = vperm.xlu0 %148, %v123
    %v150 = vpop.permute.xlu0 %149
    %153 = vset.pattern.permute.xlu0 0
    %154 = vperm.xlu0 %153, %v124
    %v155 = vpop.permute.xlu0 %154
    %158 = vset.pattern.permute.xlu0 0
    %159 = vperm.xlu0 %158, %v125
    %v160 = vpop.permute.xlu0 %159
    %163 = vset.pattern.permute.xlu0 0
    %164 = vperm.xlu0 %163, %v126
    %v165 = vpop.permute.xlu0 %164
    %168 = vset.pattern.permute.xlu0 0
    %169 = vperm.xlu0 %168, %v127
    %v170 = vpop.permute.xlu0 %169
    %173 = vset.pattern.permute.xlu0 0
    %174 = vperm.xlu0 %173, %v128
    %v175 = vpop.permute.xlu0 %174
    %177 = vset.pattern.permute.xlu0 0
    %178 = vperm.xlu0 %177, %v129
    %v179 = vpop.permute.xlu0 %178
    %181 = vset.pattern.permute.xlu0 0
    %182 = vperm.xlu0 %181, %v130
    %v183 = vpop.permute.xlu0 %182
    %185 = vset.pattern.permute.xlu0 0
    %186 = vperm.xlu0 %185, %v131
    %v187 = vpop.permute.xlu0 %186
    %vm188 = vcmask 326656
    %v190 = vsel %vm188, %v108, 0
    %v193 = vsel %vm188, %v109, 0
    %v196 = vsel %vm188, %v110, 0
    %v199 = vsel %vm188, %v111, 0
    %v202 = vsel %vm188, %v112, 0
    %v205 = vsel %vm188, %v113, 0
    %v208 = vsel %vm188, %v114, 0
    %v211 = vsel %vm188, %v115, 0
    %v214 = vsel %vm188, %v116, 0
    %v217 = vsel %vm188, %v117, 0
    %v220 = vsel %vm188, %v118, 0
    %v223 = vsel %vm188, %v119, 0
    %225 = vmatpush.msra.mxu0 0.0
    %226 = vmatpush.msra.mxu0 0.0
    %227 = vmatpush.msra.mxu0 0.0
    %228 = vmatpush.msra.mxu0 0.0
    %229 = vmatpush.msra.mxu0 0.0
    %230 = vmatpush.msra.mxu0 0.0
    %231 = vmatpush.msra.mxu0 0.0
    %232 = vmatpush.msra.mxu0 0.0
    %233 = vmatpush.msra.mxu0 0.0
    %234 = vmatpush.msra.mxu0 0.0
    %235 = vmatpush.msra.mxu0 0.0
    %236 = vmatpush.msra.mxu0 %v107
    %237 = vmatpush.msra.mxu0 %v106
    %238 = vmatpush.msra.mxu0 %v105
    %239 = vmatpush.msra.mxu0 %v104
    %240 = vmatpush.msra.mxu0 %v103
    %241 = vmatmul.f32.gmra.mxu0 %v190
    %v242 = vpop.f32.mrf.mxu0
    %v243 = vadd.f32 %v135, %v242
    %244 = vmatmul.f32.gmra.mxu0 %v193
    %v245 = vpop.f32.mrf.mxu0
    %v246 = vadd.f32 %v140, %v245
    %247 = vmatmul.f32.gmra.mxu0 %v196
    %v248 = vpop.f32.mrf.mxu0
    %v249 = vadd.f32 %v145, %v248
    %250 = vmatmul.f32.gmra.mxu0 %v199
    %v251 = vpop.f32.mrf.mxu0
    %v252 = vadd.f32 %v150, %v251
    %253 = vmatmul.f32.gmra.mxu0 %v202
    %v254 = vpop.f32.mrf.mxu0
    %v255 = vadd.f32 %v155, %v254
    %256 = vmatmul.f32.gmra.mxu0 %v205
    %v257 = vpop.f32.mrf.mxu0
    %v258 = vadd.f32 %v160, %v257
    %259 = vmatmul.f32.gmra.mxu0 %v208
    %v260 = vpop.f32.mrf.mxu0
    %v261 = vadd.f32 %v165, %v260
    %262 = vmatmul.f32.gmra.mxu0 %v211
    %v263 = vpop.f32.mrf.mxu0
    %v264 = vadd.f32 %v170, %v263
    %265 = vmatmul.f32.gmra.mxu0 %v214
    %v266 = vpop.f32.mrf.mxu0
    %267 = vmatmul.f32.gmra.mxu0 %v217
    %v268 = vpop.f32.mrf.mxu0
    %269 = vmatmul.f32.gmra.mxu0 %v220
    %v270 = vpop.f32.mrf.mxu0
    %271 = vmatmul.f32.gmra.mxu0 %v223
    %v272 = vpop.f32.mrf.mxu0
    %273 = vdwg.mxu0
    %v274 = vmax.f32 %v243, 0.0
    %v275 = vmax.f32 %v246, 0.0
    %v276 = vmax.f32 %v249, 0.0
    %v277 = vmax.f32 %v252, 0.0
    %v278 = vmax.f32 %v255, 0.0
    %v279 = vmax.f32 %v258, 0.0
    %v280 = vmax.f32 %v261, 0.0
    %v281 = vmax.f32 %v264, 0.0
    %v282 = vmax.f32 %v274, %v278
    %v283 = vmax.f32 %v275, %v279
    %v284 = vmax.f32 %v276, %v280
    %v285 = vmax.f32 %v277, %v281
    %v286 = vld [vmem:[%s4] sm:$0xff]
    %v287 = vld [vmem:[%s4 + $0x8] sm:$0xff]
    %v288 = vld [vmem:[%s4 + $0x10] sm:$0xff]
    %v289 = vld [vmem:[%s4 + $0x18] sm:$0xff]
    %v290 = vld [vmem:[%s4 + $0x20] sm:$0xff]
    %v291 = vld [vmem:[%s4 + $0x28] sm:$0xff]
    %v292 = vld [vmem:[%s4 + $0x30] sm:$0xff]
    %v293 = vld [vmem:[%s4 + $0x38] sm:$0xff]
    %v294 = vld [vmem:[%s5] sm:$0xff]
    %v295 = vld [vmem:[%s5 + $0x8] sm:$0xff]
    %v296 = vld [vmem:[%s5 + $0x10] sm:$0xff]
    %v297 = vld [vmem:[%s5 + $0x18] sm:$0xff]
    %v298 = vld [vmem:[%s5 + $0x20] sm:$0xff]
    %v299 = vld [vmem:[%s5 + $0x28] sm:$0xff]
    %v300 = vld [vmem:[%s5 + $0x30] sm:$0xff]
    %v301 = vld [vmem:[%s5 + $0x38] sm:$0xff]
    %303 = vset.pattern.permute.xlu0 0
    %304 = vperm.xlu0 %303, %v294
    %v305 = vpop.permute.xlu0 %304
    %308 = vset.pattern.permute.xlu0 0
    %309 = vperm.xlu0 %308, %v295
    %v310 = vpop.permute.xlu0 %309
    %313 = vset.pattern.permute.xlu0 0
    %314 = vperm.xlu0 %313, %v296
    %v315 = vpop.permute.xlu0 %314
    %318 = vset.pattern.permute.xlu0 0
    %319 = vperm.xlu0 %318, %v297
    %v320 = vpop.permute.xlu0 %319
    %323 = vset.pattern.permute.xlu0 0
    %324 = vperm.xlu0 %323, %v298
    %v325 = vpop.permute.xlu0 %324
    %328 = vset.pattern.permute.xlu0 0
    %329 = vperm.xlu0 %328, %v299
    %v330 = vpop.permute.xlu0 %329
    %333 = vset.pattern.permute.xlu0 0
    %334 = vperm.xlu0 %333, %v300
    %v335 = vpop.permute.xlu0 %334
    %338 = vset.pattern.permute.xlu0 0
    %339 = vperm.xlu0 %338, %v301
    %v340 = vpop.permute.xlu0 %339
    %vm342 = vcmask 261120
    %v344 = vsel %vm342, %v286, 0
    %v347 = vsel %vm342, %v287, 0
    %v350 = vsel %vm342, %v288, 0
    %v353 = vsel %vm342, %v289, 0
    %v356 = vsel %vm342, %v290, 0
    %v359 = vsel %vm342, %v291, 0
    %v362 = vsel %vm342, %v292, 0
    %v365 = vsel %vm342, %v293, 0
    %367 = vmatpush.msra.mxu0 0.0
    %368 = vmatpush.msra.mxu0 0.0
    %369 = vmatpush.msra.mxu0 0.0
    %370 = vmatpush.msra.mxu0 0.0
    %371 = vmatpush.msra.mxu0 0.0
    %372 = vmatpush.msra.mxu0 0.0
    %373 = vmatpush.msra.mxu0 0.0
    %374 = vmatpush.msra.mxu0 0.0
    %375 = vmatpush.msra.mxu0 0.0
    %376 = vmatpush.msra.mxu0 0.0
    %377 = vmatpush.msra.mxu0 0.0
    %378 = vmatpush.msra.mxu0 0.0
    %379 = vmatpush.msra.mxu0 %v285
    %380 = vmatpush.msra.mxu0 %v284
    %381 = vmatpush.msra.mxu0 %v283
    %382 = vmatpush.msra.mxu0 %v282
    %383 = vmatmul.f32.gmra.mxu0 %v344
    %v384 = vpop.f32.mrf.mxu0
    %v385 = vadd.f32 %v305, %v384
    %386 = vmatmul.f32.gmra.mxu0 %v347
    %v387 = vpop.f32.mrf.mxu0
    %v388 = vadd.f32 %v310, %v387
    %389 = vmatmul.f32.gmra.mxu0 %v350
    %v390 = vpop.f32.mrf.mxu0
    %v391 = vadd.f32 %v315, %v390
    %392 = vmatmul.f32.gmra.mxu0 %v353
    %v393 = vpop.f32.mrf.mxu0
    %v394 = vadd.f32 %v320, %v393
    %395 = vmatmul.f32.gmra.mxu0 %v356
    %v396 = vpop.f32.mrf.mxu0
    %v397 = vadd.f32 %v325, %v396
    %398 = vmatmul.f32.gmra.mxu0 %v359
    %v399 = vpop.f32.mrf.mxu0
    %v400 = vadd.f32 %v330, %v399
    %401 = vmatmul.f32.gmra.mxu0 %v362
    %v402 = vpop.f32.mrf.mxu0
    %v403 = vadd.f32 %v335, %v402
    %404 = vmatmul.f32.gmra.mxu0 %v365
    %v405 = vpop.f32.mrf.mxu0
    %v406 = vadd.f32 %v340, %v405
    %407 = vdwg.mxu0
    %v408 = vmax.f32 %v385, 0.0
    %v409 = vmax.f32 %v388, 0.0
    %v410 = vmax.f32 %v391, 0.0
    %v411 = vmax.f32 %v394, 0.0
    %v412 = vmax.f32 %v397, 0.0
    %v413 = vmax.f32 %v400, 0.0
    %v414 = vmax.f32 %v403, 0.0
    %v415 = vmax.f32 %v406, 0.0
    %v416 = vld [vmem:[%s6] sm:$0xff]
    %v417 = vld [vmem:[%s7] sm:$0xff]
    %419 = vset.pattern.permute.xlu0 0
    %420 = vperm.xlu0 %419, %v417
    %v421 = vpop.permute.xlu0 %420
    %vm423 = vcmask 523264
    %v425 = vsel %vm423, %v416, 0
    %427 = vmatpush.msra.mxu0 0.0
    %428 = vmatpush.msra.mxu0 0.0
    %429 = vmatpush.msra.mxu0 0.0
    %430 = vmatpush.msra.mxu0 0.0
    %431 = vmatpush.msra.mxu0 0.0
    %432 = vmatpush.msra.mxu0 0.0
    %433 = vmatpush.msra.mxu0 0.0
    %434 = vmatpush.msra.mxu0 0.0
    %435 = vmatpush.msra.mxu0 %v415
    %436 = vmatpush.msra.mxu0 %v414
    %437 = vmatpush.msra.mxu0 %v413
    %438 = vmatpush.msra.mxu0 %v412
    %439 = vmatpush.msra.mxu0 %v411
    %440 = vmatpush.msra.mxu0 %v410
    %441 = vmatpush.msra.mxu0 %v409
    %442 = vmatpush.msra.mxu0 %v408
    %443 = vmatmul.f32.gmra.mxu0 %v425
    %v444 = vpop.f32.mrf.mxu0
    %v445 = vadd.f32 %v421, %v444
    %446 = vdwg.mxu0
    %vm447 = vcmask 130048
    %448 = vst.msk [vmem:[#allocation2] sm:$0xff] %vm447, %v445
    // Predicated region
    $region34: #{tpu_custom_call.1} parent=1 // pred_check
      _
    $region35: #{tpu_custom_call.1} parent=1 // pred_check_branch
      %450 = sbr.rel (0) target = $region37
    $region36: #{tpu_custom_call.1} parent=1 // pred_region
      %452 = vsyncadd [#allocation3], 0
      %s454 = sshll.u32 [#allocation2], 4
      %s455 = int_to_ptr.vmem [resolvable:$true] %s454
      %s456 = sshll.u32 %s8, 4
      %s457 = int_to_ptr.hbm [resolvable:$true] %s456
      %459 = dma.vmem_to_hbm [thread:$0]  %s455, 128, %s457, [#allocation3]
    $region37: #{tpu_custom_call.1} parent=1 // pred_fallthru
      _
    // Predicated region
    $region38: #{tpu_custom_call.1} parent=1 // pred_check
      _
    $region39: #{tpu_custom_call.1} parent=1 // pred_check_branch
      %461 = sbr.rel (0) target = $region41
    $region40: #{tpu_custom_call.1} parent=1 // pred_region
      %463 = dma.done [#allocation3], 128
    $region41: #{tpu_custom_call.1} parent=1 // pred_fallthru
      _
    %464 = vsyncpa [#allocation3], 1

</llo_original>
